<compile_context>
chip_gen: v7x
topology: tpu7x:2x2x1
jax: 0.10.0
libtpu: 0.0.40
codegen_flags: <defaults>
</compile_context>

<pallas_src>
import functools

import jax
import jax.numpy as jnp
from jax.experimental import pallas as pl
from jax.experimental.pallas import tpu as pltpu


def _round_up(x, m):
    return ((x + m - 1) // m) * m


def _bce_kernel(pred_ref, label_ref, out_ref, *, valid_b, valid_n, mask_b, mask_n):
    i = pl.program_id(0)          # B-chunk index ("parallel")
    j = pl.program_id(1)          # N-chunk index ("arbitrary" reduction)

    # Zero this B-chunk's resident partial-sum block at the start of its reduction.
    @pl.when(j == 0)
    def _():
        out_ref[...] = jnp.zeros_like(out_ref)

    tb, tn = pred_ref.shape

    # Keep all math in f32 (v5e VPU/EUP have no bf16 path); only HBM dtype is narrow.
    x = pred_ref[...].astype(jnp.float32)
    y = label_ref[...].astype(jnp.float32)

    # PyTorch BCELoss clamps log terms at -100 so x == 0 or x == 1 stays finite.
    log_x = jnp.maximum(jnp.log(x), -100.0)
    log_1mx = jnp.maximum(jnp.log(1.0 - x), -100.0)
    per_elem = -(y * log_x + (1.0 - y) * log_1mx)

    # Tail masking (only traced when the shape is not block-aligned).  Any garbage
    # (even NaN) in the padded region is replaced by 0 via the select.
    if mask_b or mask_n:
        mask = None
        if mask_b:
            rows = jax.lax.broadcasted_iota(jnp.int32, (tb, tn), 0) + i * tb
            mask = rows < valid_b
        if mask_n:
            cols = jax.lax.broadcasted_iota(jnp.int32, (tb, tn), 1) + j * tn
            cmask = cols < valid_n
            mask = cmask if mask is None else jnp.logical_and(mask, cmask)
        per_elem = jnp.where(mask, per_elem, 0.0)

    # Block-local reduction, accumulated into this chunk's resident output block.
    out_ref[...] = out_ref[...] + jnp.sum(per_elem)


def bce_loss(pred, label, *, tile_b=256, tile_n=2048):
    """Mean binary cross-entropy between probabilities `pred` and targets `label`.

    pred, label: arrays of identical shape [B, N]; pred values expected in [0, 1]
    (same contract as nn.BCELoss — values outside produce NaN).
    Returns a scalar float32 equal to nn.BCELoss()(pred, label).
    """
    assert pred.shape == label.shape
    B, N = pred.shape
    total_elems = B * N

    # Shrink the block to cover small arrays (single grid step for tiny inputs),
    # otherwise use large, bandwidth-friendly blocks (~2 MiB f32 per input block).
    tb = min(tile_b, _round_up(B, 8))
    tn = min(tile_n, _round_up(N, 128))
    gb = pl.cdiv(B, tb)
    gn = pl.cdiv(N, tn)

    mask_b = (B % tb) != 0
    mask_n = (N % tn) != 0

    kernel = functools.partial(
        _bce_kernel, valid_b=B, valid_n=N, mask_b=mask_b, mask_n=mask_n
    )

    partials = pl.pallas_call(
        kernel,
        out_shape=jax.ShapeDtypeStruct((gb, 1, 1), jnp.float32),
        grid_spec=pltpu.PrefetchScalarGridSpec(
            num_scalar_prefetch=0,
            grid=(gb, gn),
            in_specs=[
                pl.BlockSpec((tb, tn), lambda i, j: (i, j)),
                pl.BlockSpec((tb, tn), lambda i, j: (i, j)),
            ],
            out_specs=pl.BlockSpec((1, 1, 1), lambda i, j: (i, 0, 0)),
        ),
        compiler_params=pltpu.CompilerParams(
            # B-chunks are independent (megacore-shardable on v7x); N-chunks are
            # the sequential reduction axis.
            dimension_semantics=("parallel", "arbitrary"),
        ),
    )(pred, label)  # native dtypes: no wrapper cast -> no extra HBM traffic

    # Tiny final reduction + mean in plain JAX.
    return jnp.sum(partials) / jnp.float32(total_elems)


def _reference(pred, label):
    pred = pred.astype(jnp.float32)
    label = label.astype(jnp.float32)
    return jnp.mean(
        -(
            label * jnp.maximum(jnp.log(pred), -100.0)
            + (1.0 - label) * jnp.maximum(jnp.log(1.0 - pred), -100.0)
        )
    )


if __name__ == "__main__":
    key = jax.random.PRNGKey(0)
    k1, k2, k3, k4 = jax.random.split(key, 4)

    # Case 1: small KG-style aligned shape: batch=8 triples, 256 candidate scores.
    B, N = 8, 256
    pred = jax.nn.sigmoid(jax.random.normal(k1, (B, N), dtype=jnp.float32))
    label = (jax.random.uniform(k2, (B, N)) < 0.1).astype(jnp.float32)
    loss = bce_loss(pred, label)
    jax.block_until_ready(loss)
    ref = _reference(pred, label)
    assert jnp.allclose(loss, ref, rtol=1e-5, atol=1e-6), (loss, ref)

    # Case 2: unaligned shape exercising the tail-mask path.
    B2, N2 = 5, 300
    pred2 = jax.nn.sigmoid(jax.random.normal(k3, (B2, N2), dtype=jnp.float32))
    label2 = (jax.random.uniform(k4, (B2, N2)) < 0.1).astype(jnp.float32)
    loss2 = bce_loss(pred2, label2)
    jax.block_until_ready(loss2)
    ref2 = _reference(pred2, label2)
    assert jnp.allclose(loss2, ref2, rtol=1e-5, atol=1e-6), (loss2, ref2)

    print("KERNEL_OK")
</pallas_src>

<mosaic_0001>
module attributes {stable_mosaic.version = 11 : i64} {
  func.func @_bce_kernel(%arg0: i32, %arg1: i32, %arg2: memref<8x256xf32, #tpu.memory_space<vmem>>, %arg3: memref<8x256xf32, #tpu.memory_space<vmem>>, %arg4: memref<1x1x1xf32, #tpu.memory_space<vmem>>) attributes {dimension_semantics = [#tpu.dimension_semantics<parallel>, #tpu.dimension_semantics<arbitrary>], iteration_bounds = array<i64: 1, 1>, scalar_prefetch = 0 : i64, scratch_operands = 0 : i64, tpu.core_type = #tpu.core_type<tc>, window_params = [{transform_indices = @transform_0, window_bounds = array<i64: 8, 256>}, {transform_indices = @transform_1, window_bounds = array<i64: 8, 256>}, {transform_indices = @transform_2, window_bounds = array<i64: 1, 1, 1>}]} {
    %c0_i32 = arith.constant 0 : i32
    %0 = arith.cmpi eq, %arg1, %c0_i32 : i32
    %1 = arith.extui %0 : i1 to i32
    %c0_i32_0 = arith.constant 0 : i32
    %2 = arith.cmpi ne, %1, %c0_i32_0 : i32
    scf.if %2 {
      %cst_15 = arith.constant 0.000000e+00 : f32
      %28 = vector.broadcast %cst_15 : f32 to vector<1x1x1xf32>
      %c0_16 = arith.constant 0 : index
      %c0_17 = arith.constant 0 : index
      %c0_18 = arith.constant 0 : index
      %29 = vector.load %arg4[%c0_16, %c0_17, %c0_18] : memref<1x1x1xf32, #tpu.memory_space<vmem>>, vector<1x1x1xf32>
      tpu.vector_store %arg4[%c0_16, %c0_17, %c0_18], %28 {strides = array<i32>} : memref<1x1x1xf32, #tpu.memory_space<vmem>>, vector<1x1x1xf32>,
    } else {
    }
    %c0 = arith.constant 0 : index
    %c0_1 = arith.constant 0 : index
    %3 = vector.load %arg2[%c0, %c0_1] : memref<8x256xf32, #tpu.memory_space<vmem>>, vector<8x256xf32>
    %c0_2 = arith.constant 0 : index
    %c0_3 = arith.constant 0 : index
    %4 = vector.load %arg3[%c0_2, %c0_3] : memref<8x256xf32, #tpu.memory_space<vmem>>, vector<8x256xf32>
    %5 = math.log %3 : vector<8x256xf32>
    %cst = arith.constant -1.000000e+02 : f32
    %6 = vector.broadcast %cst : f32 to vector<8x256xf32>
    %7 = arith.maximumf %5, %6 : vector<8x256xf32>
    %cst_4 = arith.constant 1.000000e+00 : f32
    %8 = vector.broadcast %cst_4 : f32 to vector<8x256xf32>
    %9 = arith.subf %8, %3 : vector<8x256xf32>
    %10 = math.log %9 : vector<8x256xf32>
    %cst_5 = arith.constant -1.000000e+02 : f32
    %11 = vector.broadcast %cst_5 : f32 to vector<8x256xf32>
    %12 = arith.maximumf %10, %11 : vector<8x256xf32>
    %13 = arith.mulf %4, %7 : vector<8x256xf32>
    %cst_6 = arith.constant 1.000000e+00 : f32
    %14 = vector.broadcast %cst_6 : f32 to vector<8x256xf32>
    %15 = arith.subf %14, %4 : vector<8x256xf32>
    %16 = arith.mulf %15, %12 : vector<8x256xf32>
    %17 = arith.addf %13, %16 : vector<8x256xf32>
    %cst_7 = arith.constant 0.000000e+00 : f32
    %18 = vector.broadcast %cst_7 : f32 to vector<8x256xf32>
    %19 = arith.subf %18, %17 : vector<8x256xf32>
    %c0_8 = arith.constant 0 : index
    %c0_9 = arith.constant 0 : index
    %c0_10 = arith.constant 0 : index
    %20 = vector.load %arg4[%c0_8, %c0_9, %c0_10] : memref<1x1x1xf32, #tpu.memory_space<vmem>>, vector<1x1x1xf32>
    %21 = vector.shape_cast %19 : vector<8x256xf32> to vector<1x8x256xf32>
    %cst_11 = arith.constant dense<0.000000e+00> : vector<1xf32>
    %22 = vector.multi_reduction <add>, %21, %cst_11 [1, 2] : vector<1x8x256xf32> to vector<1xf32>
    %23 = vector.shape_cast %22 : vector<1xf32> to vector<1x1x1xf32>
    %24 = vector.extract %23[0, 0, 0] : f32 from vector<1x1x1xf32>
    %25 = vector.broadcast %24 : f32 to vector<1x1x1xf32>
    %26 = arith.addf %20, %25 : vector<1x1x1xf32>
    %c0_12 = arith.constant 0 : index
    %c0_13 = arith.constant 0 : index
    %c0_14 = arith.constant 0 : index
    %27 = vector.load %arg4[%c0_12, %c0_13, %c0_14] : memref<1x1x1xf32, #tpu.memory_space<vmem>>, vector<1x1x1xf32>
    tpu.vector_store %arg4[%c0_12, %c0_13, %c0_14], %26 {strides = array<i32>} : memref<1x1x1xf32, #tpu.memory_space<vmem>>, vector<1x1x1xf32>,
    return
  }
  func.func @transform_0(%arg0: i32, %arg1: i32) -> (i32, i32) {
    %c0_i32 = arith.constant 0 : i32
    return %arg0, %arg1 : i32, i32
  }
  func.func @transform_1(%arg0: i32, %arg1: i32) -> (i32, i32) {
    %c0_i32 = arith.constant 0 : i32
    return %arg0, %arg1 : i32, i32
  }
  func.func @transform_2(%arg0: i32, %arg1: i32) -> (i32, i32, i32) {
    %c0_i32 = arith.constant 0 : i32
    %c0_i32_0 = arith.constant 0 : i32
    %c0_i32_1 = arith.constant 0 : i32
    return %arg0, %c0_i32, %c0_i32_0 : i32, i32, i32
  }
}

</mosaic_0001>

<llo_original>
// kernel: tpu_custom_call.1
$region0: #{tpu_custom_call.1}
  #allocation0 [shape = 'u32[]', space=smem, size = 0x4, offset = 0x4, fixed_abs, tag = 'smem constant byte address 0x4 - core index']
  #allocation1 [shape = 'u32[144,128]{1,0:T(1,128)}', space=vmem, size = 0x12000, scoped, tag = 'internal scratch']
  %s0 = inlined_call_operand.hbm [shape: f32[8,256], index: 0, kind: input, shape index: {}]
  %s1 = inlined_call_operand.hbm [shape: f32[8,256], index: 1, kind: input, shape index: {}]
  %s2 = inlined_call_operand.hbm [shape: f32[1,1,1], index: 2, kind: output, shape index: {}]
  %s3 = sld [smem:[#allocation0]]
  $region30: #{tpu_custom_call.1} parent=0
    _
  %s5 = ssub.s32 1, %s3
  %s6 = scalar_select 0, %s5, %s3
  $region1: #{tpu_custom_call.1} parent=0
    #allocation2 [shape = 'u8[8192]{0}', space=vmem, size = 0x2000, scoped, tag = 'input window, operand 0, single buffered']
    #allocation3 [shape = 's32[1]{0}', space=sflag, size = 0x4, scoped, tag = 'scoped memory for tpu_custom_call.1']
    #allocation4 [shape = 's32[1]{0}', space=sflag, size = 0x4, scoped, tag = 'scoped memory for tpu_custom_call.1']
    #allocation5 [shape = 'u8[8192]{0}', space=vmem, size = 0x2000, scoped, tag = 'input window, operand 1, single buffered']
    #allocation6 [shape = 's32[1]{0}', space=sflag, size = 0x4, scoped, tag = 'scoped memory for tpu_custom_call.1']
    #allocation7 [shape = 'u8[512]{0}', space=vmem, size = 0x400, scoped, tag = 'output window, operand 0, single buffered']
    %7 = vsyncpa [#allocation3], 0
    %8 = vsyncpa [#allocation6], 0
    %9 = vsyncpa [#allocation4], 0
    // Predicated region
    $region2: #{tpu_custom_call.1} parent=1 // pred_check
      _
    $region3: #{tpu_custom_call.1} parent=1 // pred_check_branch
      %11 = sbr.rel (0) target = $region5
    $region4: #{tpu_custom_call.1} parent=1 // pred_region
      %s13 = ssub.s32 256, 256
      %14 = vsyncadd [#allocation3], %s13
      %s16 = sshll.u32 [#allocation2], 4
      %s17 = int_to_ptr.vmem [resolvable:$true] %s16
      %19 = dma.hbm_to_vmem [thread:$0]  %s0, 256, %s17, [#allocation3]
    $region5: #{tpu_custom_call.1} parent=1 // pred_fallthru
      _
    // Predicated region
    $region6: #{tpu_custom_call.1} parent=1 // pred_check
      _
    $region7: #{tpu_custom_call.1} parent=1 // pred_check_branch
      %21 = sbr.rel (0) target = $region9
    $region8: #{tpu_custom_call.1} parent=1 // pred_region
      %s23 = ssub.s32 256, 256
      %24 = vsyncadd [#allocation6], %s23
      %s26 = sshll.u32 [#allocation5], 4
      %s27 = int_to_ptr.vmem [resolvable:$true] %s26
      %29 = dma.hbm_to_vmem [thread:$0]  %s1, 256, %s27, [#allocation6]
    $region9: #{tpu_custom_call.1} parent=1 // pred_fallthru
      _
    // Predicated region
    $region10: #{tpu_custom_call.1} parent=1 // pred_check
      _
    $region11: #{tpu_custom_call.1} parent=1 // pred_check_branch
      %31 = sbr.rel (0) target = $region13
    $region12: #{tpu_custom_call.1} parent=1 // pred_region
      %32 = dma.done [#allocation3], 256
    $region13: #{tpu_custom_call.1} parent=1 // pred_fallthru
      _
    // Predicated region
    $region14: #{tpu_custom_call.1} parent=1 // pred_check
      _
    $region15: #{tpu_custom_call.1} parent=1 // pred_check_branch
      %34 = sbr.rel (0) target = $region17
    $region16: #{tpu_custom_call.1} parent=1 // pred_region
      %35 = dma.done [#allocation6], 256
    $region17: #{tpu_custom_call.1} parent=1 // pred_fallthru
      _
    %p36 = scmp.eq.s32.totalorder 0, 0
    // Predicated region
    $region18: #{tpu_custom_call.1} parent=1 // pred_check
      %p37 = pneg %p36
    $region19: #{tpu_custom_call.1} parent=1 // pred_check_branch
      %39 = sbr.rel (%p37) target = $region21
    $region20: #{tpu_custom_call.1} parent=1 // pred_region
      %vm40 = vcmask 0
      %41 = vst.msk [vmem:[#allocation7] sm:$0x1] %vm40, 0.0
    $region21: #{tpu_custom_call.1} parent=1 // pred_fallthru
      _
    %v42 = vld [vmem:[#allocation2] sm:$0xff]
    %v43 = vld [vmem:[#allocation2 + $0x8] sm:$0xff]
    %v44 = vld [vmem:[#allocation5] sm:$0xff]
    %v45 = vld [vmem:[#allocation5 + $0x8] sm:$0xff]
    %v46 = vlog2.pop %v42
    %v47 = vmul.f32 %v46, 0.6931472
    %v48 = vlog2.pop %v43
    %v49 = vmul.f32 %v48, 0.6931472
    %v50 = vmax.f32 %v47, -100.0
    %v51 = vmax.f32 %v49, -100.0
    %v52 = vsub.f32 1.0, %v42
    %v53 = vsub.f32 1.0, %v43
    %v54 = vlog2.pop %v52
    %v55 = vmul.f32 %v54, 0.6931472
    %v56 = vlog2.pop %v53
    %v57 = vmul.f32 %v56, 0.6931472
    %v58 = vmax.f32 %v55, -100.0
    %v59 = vmax.f32 %v57, -100.0
    %v60 = vmul.f32 %v44, %v50
    %v61 = vmul.f32 %v45, %v51
    %v62 = vsub.f32 1.0, %v44
    %v63 = vsub.f32 1.0, %v45
    %v64 = vmul.f32 %v62, %v58
    %v65 = vmul.f32 %v63, %v59
    %v66 = vadd.f32 %v60, %v64
    %v67 = vadd.f32 %v61, %v65
    %v68 = vsub.f32 0.0, %v66
    %v69 = vsub.f32 0.0, %v67
    %v70 = vld [vmem:[#allocation7] sm:$0x1]
    %v71 = vadd.f32 %v68, %v69
    %72 = vadd.xlane.f32.xlu0 %v71
    %v73 = vpop.xlane.xlu0 %72
    %v74 = vrot.slane %v73, 4
    %v75 = vadd.f32 %v73, %v74
    %v76 = vrot.slane %v75, 2
    %v77 = vadd.f32 %v75, %v76
    %v78 = vrot.slane %v77, 1
    %v79 = vadd.f32 %v77, %v78
    %s80 = vtos %v79
    %v81 = vstv %s80
    %v82 = vadd.f32 %v70, %v81
    %vm83 = vcmask 0
    %84 = vst.msk [vmem:[#allocation7] sm:$0x1] %vm83, %v82
    // Predicated region
    $region22: #{tpu_custom_call.1} parent=1 // pred_check
      _
    $region23: #{tpu_custom_call.1} parent=1 // pred_check_branch
      %86 = sbr.rel (0) target = $region25
    $region24: #{tpu_custom_call.1} parent=1 // pred_region
      %s88 = ssub.s32 16, 16
      %89 = vsyncadd [#allocation4], %s88
      %s91 = sshll.u32 [#allocation7], 4
      %s92 = int_to_ptr.vmem [resolvable:$true] %s91
      %94 = dma.vmem_to_hbm [thread:$0]  %s92, 16, %s2, [#allocation4]
    $region25: #{tpu_custom_call.1} parent=1 // pred_fallthru
      _
    // Predicated region
    $region26: #{tpu_custom_call.1} parent=1 // pred_check
      _
    $region27: #{tpu_custom_call.1} parent=1 // pred_check_branch
      %96 = sbr.rel (0) target = $region29
    $region28: #{tpu_custom_call.1} parent=1 // pred_region
      %97 = dma.done [#allocation4], 16
    $region29: #{tpu_custom_call.1} parent=1 // pred_fallthru
      _
    %98 = vsyncpa [#allocation3], 1
    %99 = vsyncpa [#allocation6], 1
    %100 = vsyncpa [#allocation4], 1

</llo_original>
